<compile_context>
chip_gen: v7x
topology: tpu7x:2x2x1
jax: 0.10.0
libtpu: 0.0.40
codegen_flags: <defaults>
</compile_context>

<pallas_src>
import functools

import jax
import jax.numpy as jnp
from jax.experimental import pallas as pl
from jax.experimental.pallas import tpu as pltpu


def _causal_rnn_kernel(x_ref, wih_ref, bias_ref, whh_ref, wout_ref, bout_ref, o_ref,
                       *, T, B, H):
    """Single-invocation fused kernel.

    x_ref    : (T*B, I)  time-major input rows (row = t*B + b)
    wih_ref  : (I, H)    W_ih^T
    bias_ref : (1, H)    b_ih + b_hh (folded)
    whh_ref  : (H, H)    W_hh^T  (row k == column k of W_hh)
    wout_ref : (H, O)    W_lin^T
    bout_ref : (1, O)    b_lin
    o_ref    : (T*B, O)  sigmoid(linear(h_t)), time-major
    """
    # --- Input projection: ONE MXU matmul for all time steps (off the serial chain). ---
    pre = jnp.dot(x_ref[...], wih_ref[...],
                  preferred_element_type=jnp.float32) + bias_ref[...]        # (T*B, H)

    # --- Hoist W_hh^T row slices + sublane broadcasts out of the time loop (no per-iter
    #     broadcast_in_dim re-emission). ---
    whh = whh_ref[...]                                                       # (H, H)
    whh_rows = [jnp.broadcast_to(whh[k:k + 1, :], (B, H)) for k in range(H)]

    # --- Serial recurrence on the VPU.  T is static and small -> unrolled at trace time.
    #     Each step: H broadcast multiply-adds (tree-summed) + one tanh; no MXU round trip
    #     on the critical path (works on v5e/v6e/v7x alike, stays in f32). ---
    h = jnp.zeros((B, H), jnp.float32)
    hs = []
    for t in range(T):
        pre_t = pre[t * B:(t + 1) * B, :]                                    # contiguous slice
        terms = [pre_t] + [h[:, k:k + 1] * whh_rows[k] for k in range(H)]
        while len(terms) > 1:                                                # tree reduction
            nxt = [terms[i] + terms[i + 1] for i in range(0, len(terms) - 1, 2)]
            if len(terms) % 2:
                nxt.append(terms[-1])
            terms = nxt
        h = jnp.tanh(terms[0])                                               # (B, H)
        hs.append(h)

    # --- Batched output head: one matmul, one bias add, one sigmoid, one store. ---
    hs_tm = jnp.concatenate(hs, axis=0)                                      # (T*B, H)
    y = jnp.dot(hs_tm, wout_ref[...],
                preferred_element_type=jnp.float32) + bout_ref[...]          # (T*B, O)
    o_ref[...] = jax.nn.sigmoid(y).astype(o_ref.dtype)


def prepare_params(w_ih, b_ih, w_hh, b_hh, w_lin, b_lin):
    """One-time (model-load) weight preprocessing, hoisted out of the per-call path."""
    f32 = jnp.float32
    wih_t = jnp.asarray(w_ih, f32).T                                         # (I, H)
    bias = (jnp.asarray(b_ih, f32) + jnp.asarray(b_hh, f32)).reshape(1, -1)  # (1, H)
    whh_t = jnp.asarray(w_hh, f32).T                                         # (H, H)
    wout_t = jnp.asarray(w_lin, f32).T                                       # (H, O)
    bout = jnp.asarray(b_lin, f32).reshape(1, -1)                            # (1, O)
    return wih_t, bias, whh_t, wout_t, bout


@jax.jit
def causal_rnn_forward(x, wih_t, bias, whh_t, wout_t, bout):
    """x: (B, T, I) batch_first, like PyTorch. Returns sigmoid(linear(rnn(x))).squeeze()."""
    B, T, I = x.shape
    H = whh_t.shape[0]
    O = wout_t.shape[1]

    # Tiny layout op: batch-first -> time-major rows for the kernel (fused into one XLA op).
    x_tm = jnp.transpose(x.astype(jnp.float32), (1, 0, 2)).reshape(T * B, I)

    kernel = functools.partial(_causal_rnn_kernel, T=T, B=B, H=H)
    out_tm = pl.pallas_call(
        kernel,
        out_shape=jax.ShapeDtypeStruct((T * B, O), jnp.float32),
        grid=(1,),                                                           # single invocation
        in_specs=[
            pl.BlockSpec((T * B, I), lambda i: (0, 0)),                      # x (time-major)
            pl.BlockSpec((I, H), lambda i: (0, 0)),                          # W_ih^T
            pl.BlockSpec((1, H), lambda i: (0, 0)),                          # folded RNN bias
            pl.BlockSpec((H, H), lambda i: (0, 0)),                          # W_hh^T
            pl.BlockSpec((H, O), lambda i: (0, 0)),                          # W_lin^T
            pl.BlockSpec((1, O), lambda i: (0, 0)),                          # b_lin
        ],
        out_specs=pl.BlockSpec((T * B, O), lambda i: (0, 0)),
        compiler_params=pltpu.CompilerParams(
            dimension_semantics=("arbitrary",),
        ),
    )(x_tm, wih_t, bias, whh_t, wout_t, bout)

    out = jnp.transpose(out_tm.reshape(T, B, O), (1, 0, 2))                  # (B, T, O)
    # Dropout (p=0.3) is identity at inference time.
    return jnp.squeeze(out)                                                  # mirrors torch .squeeze()


def _reference_forward(x, w_ih, b_ih, w_hh, b_hh, w_lin, b_lin):
    """Pure-JAX reference matching torch nn.RNN(batch_first=True) + Linear + sigmoid."""
    prec = jax.lax.Precision.HIGHEST
    B = x.shape[0]
    H = w_hh.shape[0]

    def step(h, x_t):
        h_new = jnp.tanh(jnp.dot(x_t, w_ih.T, precision=prec) + b_ih
                         + jnp.dot(h, w_hh.T, precision=prec) + b_hh)
        return h_new, h_new

    h0 = jnp.zeros((B, H), jnp.float32)
    _, hs = jax.lax.scan(step, h0, jnp.transpose(x, (1, 0, 2)))              # (T, B, H)
    hs = jnp.transpose(hs, (1, 0, 2))                                        # (B, T, H)
    out = jax.nn.sigmoid(jnp.dot(hs, w_lin.T, precision=prec) + b_lin)
    return jnp.squeeze(out)


if __name__ == "__main__":
    # Module defaults: input_size=124, hidden_size=10, num_layers=1, output_dim=3
    B, T, I, H, O = 4, 8, 124, 10, 3

    key = jax.random.PRNGKey(0)
    k = jax.random.split(key, 7)
    scale = 1.0 / jnp.sqrt(H)  # PyTorch RNN/Linear default init range
    x = jax.random.normal(k[0], (B, T, I), jnp.float32)
    w_ih = jax.random.uniform(k[1], (H, I), jnp.float32, -scale, scale)      # weight_ih_l0
    b_ih = jax.random.uniform(k[2], (H,), jnp.float32, -scale, scale)
    w_hh = jax.random.uniform(k[3], (H, H), jnp.float32, -scale, scale)      # weight_hh_l0
    b_hh = jax.random.uniform(k[4], (H,), jnp.float32, -scale, scale)
    w_lin = jax.random.uniform(k[5], (O, H), jnp.float32, -scale, scale)     # Linear weight
    b_lin = jax.random.uniform(k[6], (O,), jnp.float32, -scale, scale)

    params = prepare_params(w_ih, b_ih, w_hh, b_hh, w_lin, b_lin)            # once, off hot path
    out = jax.block_until_ready(causal_rnn_forward(x, *params))

    ref = _reference_forward(x, w_ih, b_ih, w_hh, b_hh, w_lin, b_lin)
    assert out.shape == (B, T, O), out.shape
    # Tolerance allows for MXU-vs-XLA f32 matmul pass differences on the input projection.
    assert jnp.allclose(out, ref, atol=5e-3, rtol=5e-3), "mismatch vs reference"

    print("KERNEL_OK")
</pallas_src>

<mosaic_0001>
module attributes {stable_mosaic.version = 11 : i64} {
  func.func @_causal_rnn_kernel(%arg0: i32, %arg1: memref<32x124xf32, #tpu.memory_space<vmem>>, %arg2: memref<124x10xf32, #tpu.memory_space<vmem>>, %arg3: memref<1x10xf32, #tpu.memory_space<vmem>>, %arg4: memref<10x10xf32, #tpu.memory_space<vmem>>, %arg5: memref<10x3xf32, #tpu.memory_space<vmem>>, %arg6: memref<1x3xf32, #tpu.memory_space<vmem>>, %arg7: memref<32x3xf32, #tpu.memory_space<vmem>>) attributes {dimension_semantics = [#tpu.dimension_semantics<arbitrary>], iteration_bounds = array<i64: 1>, scalar_prefetch = 0 : i64, scratch_operands = 0 : i64, tpu.core_type = #tpu.core_type<tc>, window_params = [{pipeline_mode = #tpu.pipeline_mode<synchronous>, transform_indices = @transform_0, window_bounds = array<i64: 32, 124>}, {pipeline_mode = #tpu.pipeline_mode<synchronous>, transform_indices = @transform_1, window_bounds = array<i64: 124, 10>}, {pipeline_mode = #tpu.pipeline_mode<synchronous>, transform_indices = @transform_2, window_bounds = array<i64: 1, 10>}, {pipeline_mode = #tpu.pipeline_mode<synchronous>, transform_indices = @transform_3, window_bounds = array<i64: 10, 10>}, {pipeline_mode = #tpu.pipeline_mode<synchronous>, transform_indices = @transform_4, window_bounds = array<i64: 10, 3>}, {pipeline_mode = #tpu.pipeline_mode<synchronous>, transform_indices = @transform_5, window_bounds = array<i64: 1, 3>}, {pipeline_mode = #tpu.pipeline_mode<synchronous>, transform_indices = @transform_6, window_bounds = array<i64: 32, 3>}]} {
    %c0 = arith.constant 0 : index
    %c0_0 = arith.constant 0 : index
    %0 = vector.load %arg1[%c0, %c0_0] : memref<32x124xf32, #tpu.memory_space<vmem>>, vector<32x124xf32>
    %c0_1 = arith.constant 0 : index
    %c0_2 = arith.constant 0 : index
    %1 = vector.load %arg2[%c0_1, %c0_2] : memref<124x10xf32, #tpu.memory_space<vmem>>, vector<124x10xf32>
    %cst = arith.constant dense<0.000000e+00> : vector<32x10xf32>
    %2 = tpu.matmul %0, %1, %cst {dimension_numbers = #tpu.dot_dimension_numbers<[1], [0], [0], [1], [0, 0, 1, 1], [], []>} : vector<32x124xf32>, vector<124x10xf32>, vector<32x10xf32> -> vector<32x10xf32>
    %c0_3 = arith.constant 0 : index
    %c0_4 = arith.constant 0 : index
    %3 = vector.load %arg3[%c0_3, %c0_4] : memref<1x10xf32, #tpu.memory_space<vmem>>, vector<1x10xf32>
    %4 = vector.broadcast %3 : vector<1x10xf32> to vector<32x10xf32>
    %5 = arith.addf %2, %4 : vector<32x10xf32>
    %c0_5 = arith.constant 0 : index
    %c0_6 = arith.constant 0 : index
    %6 = vector.load %arg4[%c0_5, %c0_6] : memref<10x10xf32, #tpu.memory_space<vmem>>, vector<10x10xf32>
    %7 = vector.extract_strided_slice %6 {offsets = [0, 0], sizes = [1, 10], strides = [1, 1]} : vector<10x10xf32> to vector<1x10xf32>
    %8 = vector.shape_cast %7 : vector<1x10xf32> to vector<1x10xf32>
    %9 = vector.broadcast %8 : vector<1x10xf32> to vector<4x10xf32>
    %10 = vector.extract_strided_slice %6 {offsets = [1, 0], sizes = [1, 10], strides = [1, 1]} : vector<10x10xf32> to vector<1x10xf32>
    %11 = vector.shape_cast %10 : vector<1x10xf32> to vector<1x10xf32>
    %12 = vector.broadcast %11 : vector<1x10xf32> to vector<4x10xf32>
    %13 = vector.extract_strided_slice %6 {offsets = [2, 0], sizes = [1, 10], strides = [1, 1]} : vector<10x10xf32> to vector<1x10xf32>
    %14 = vector.shape_cast %13 : vector<1x10xf32> to vector<1x10xf32>
    %15 = vector.broadcast %14 : vector<1x10xf32> to vector<4x10xf32>
    %16 = vector.extract_strided_slice %6 {offsets = [3, 0], sizes = [1, 10], strides = [1, 1]} : vector<10x10xf32> to vector<1x10xf32>
    %17 = vector.shape_cast %16 : vector<1x10xf32> to vector<1x10xf32>
    %18 = vector.broadcast %17 : vector<1x10xf32> to vector<4x10xf32>
    %19 = vector.extract_strided_slice %6 {offsets = [4, 0], sizes = [1, 10], strides = [1, 1]} : vector<10x10xf32> to vector<1x10xf32>
    %20 = vector.shape_cast %19 : vector<1x10xf32> to vector<1x10xf32>
    %21 = vector.broadcast %20 : vector<1x10xf32> to vector<4x10xf32>
    %22 = vector.extract_strided_slice %6 {offsets = [5, 0], sizes = [1, 10], strides = [1, 1]} : vector<10x10xf32> to vector<1x10xf32>
    %23 = vector.shape_cast %22 : vector<1x10xf32> to vector<1x10xf32>
    %24 = vector.broadcast %23 : vector<1x10xf32> to vector<4x10xf32>
    %25 = vector.extract_strided_slice %6 {offsets = [6, 0], sizes = [1, 10], strides = [1, 1]} : vector<10x10xf32> to vector<1x10xf32>
    %26 = vector.shape_cast %25 : vector<1x10xf32> to vector<1x10xf32>
    %27 = vector.broadcast %26 : vector<1x10xf32> to vector<4x10xf32>
    %28 = vector.extract_strided_slice %6 {offsets = [7, 0], sizes = [1, 10], strides = [1, 1]} : vector<10x10xf32> to vector<1x10xf32>
    %29 = vector.shape_cast %28 : vector<1x10xf32> to vector<1x10xf32>
    %30 = vector.broadcast %29 : vector<1x10xf32> to vector<4x10xf32>
    %31 = vector.extract_strided_slice %6 {offsets = [8, 0], sizes = [1, 10], strides = [1, 1]} : vector<10x10xf32> to vector<1x10xf32>
    %32 = vector.shape_cast %31 : vector<1x10xf32> to vector<1x10xf32>
    %33 = vector.broadcast %32 : vector<1x10xf32> to vector<4x10xf32>
    %34 = vector.extract_strided_slice %6 {offsets = [9, 0], sizes = [1, 10], strides = [1, 1]} : vector<10x10xf32> to vector<1x10xf32>
    %35 = vector.shape_cast %34 : vector<1x10xf32> to vector<1x10xf32>
    %36 = vector.broadcast %35 : vector<1x10xf32> to vector<4x10xf32>
    %cst_7 = arith.constant 0.000000e+00 : f32
    %37 = vector.broadcast %cst_7 : f32 to vector<4x10xf32>
    %38 = vector.extract_strided_slice %5 {offsets = [0, 0], sizes = [4, 10], strides = [1, 1]} : vector<32x10xf32> to vector<4x10xf32>
    %39 = vector.extract_strided_slice %37 {offsets = [0, 0], sizes = [4, 1], strides = [1, 1]} : vector<4x10xf32> to vector<4x1xf32>
    %40 = vector.broadcast %39 : vector<4x1xf32> to vector<4x10xf32>
    %41 = arith.mulf %40, %9 : vector<4x10xf32>
    %42 = vector.extract_strided_slice %37 {offsets = [0, 1], sizes = [4, 1], strides = [1, 1]} : vector<4x10xf32> to vector<4x1xf32>
    %43 = vector.broadcast %42 : vector<4x1xf32> to vector<4x10xf32>
    %44 = arith.mulf %43, %12 : vector<4x10xf32>
    %45 = vector.extract_strided_slice %37 {offsets = [0, 2], sizes = [4, 1], strides = [1, 1]} : vector<4x10xf32> to vector<4x1xf32>
    %46 = vector.broadcast %45 : vector<4x1xf32> to vector<4x10xf32>
    %47 = arith.mulf %46, %15 : vector<4x10xf32>
    %48 = vector.extract_strided_slice %37 {offsets = [0, 3], sizes = [4, 1], strides = [1, 1]} : vector<4x10xf32> to vector<4x1xf32>
    %49 = vector.broadcast %48 : vector<4x1xf32> to vector<4x10xf32>
    %50 = arith.mulf %49, %18 : vector<4x10xf32>
    %51 = vector.extract_strided_slice %37 {offsets = [0, 4], sizes = [4, 1], strides = [1, 1]} : vector<4x10xf32> to vector<4x1xf32>
    %52 = vector.broadcast %51 : vector<4x1xf32> to vector<4x10xf32>
    %53 = arith.mulf %52, %21 : vector<4x10xf32>
    %54 = vector.extract_strided_slice %37 {offsets = [0, 5], sizes = [4, 1], strides = [1, 1]} : vector<4x10xf32> to vector<4x1xf32>
    %55 = vector.broadcast %54 : vector<4x1xf32> to vector<4x10xf32>
    %56 = arith.mulf %55, %24 : vector<4x10xf32>
    %57 = vector.extract_strided_slice %37 {offsets = [0, 6], sizes = [4, 1], strides = [1, 1]} : vector<4x10xf32> to vector<4x1xf32>
    %58 = vector.broadcast %57 : vector<4x1xf32> to vector<4x10xf32>
    %59 = arith.mulf %58, %27 : vector<4x10xf32>
    %60 = vector.extract_strided_slice %37 {offsets = [0, 7], sizes = [4, 1], strides = [1, 1]} : vector<4x10xf32> to vector<4x1xf32>
    %61 = vector.broadcast %60 : vector<4x1xf32> to vector<4x10xf32>
    %62 = arith.mulf %61, %30 : vector<4x10xf32>
    %63 = vector.extract_strided_slice %37 {offsets = [0, 8], sizes = [4, 1], strides = [1, 1]} : vector<4x10xf32> to vector<4x1xf32>
    %64 = vector.broadcast %63 : vector<4x1xf32> to vector<4x10xf32>
    %65 = arith.mulf %64, %33 : vector<4x10xf32>
    %66 = vector.extract_strided_slice %37 {offsets = [0, 9], sizes = [4, 1], strides = [1, 1]} : vector<4x10xf32> to vector<4x1xf32>
    %67 = vector.broadcast %66 : vector<4x1xf32> to vector<4x10xf32>
    %68 = arith.mulf %67, %36 : vector<4x10xf32>
    %69 = arith.addf %38, %41 : vector<4x10xf32>
    %70 = arith.addf %44, %47 : vector<4x10xf32>
    %71 = arith.addf %50, %53 : vector<4x10xf32>
    %72 = arith.addf %56, %59 : vector<4x10xf32>
    %73 = arith.addf %62, %65 : vector<4x10xf32>
    %74 = arith.addf %69, %70 : vector<4x10xf32>
    %75 = arith.addf %71, %72 : vector<4x10xf32>
    %76 = arith.addf %73, %68 : vector<4x10xf32>
    %77 = arith.addf %74, %75 : vector<4x10xf32>
    %78 = arith.addf %77, %76 : vector<4x10xf32>
    %79 = math.tanh %78 : vector<4x10xf32>
    %80 = vector.extract_strided_slice %5 {offsets = [4, 0], sizes = [4, 10], strides = [1, 1]} : vector<32x10xf32> to vector<4x10xf32>
    %81 = vector.extract_strided_slice %79 {offsets = [0, 0], sizes = [4, 1], strides = [1, 1]} : vector<4x10xf32> to vector<4x1xf32>
    %82 = vector.broadcast %81 : vector<4x1xf32> to vector<4x10xf32>
    %83 = arith.mulf %82, %9 : vector<4x10xf32>
    %84 = vector.extract_strided_slice %79 {offsets = [0, 1], sizes = [4, 1], strides = [1, 1]} : vector<4x10xf32> to vector<4x1xf32>
    %85 = vector.broadcast %84 : vector<4x1xf32> to vector<4x10xf32>
    %86 = arith.mulf %85, %12 : vector<4x10xf32>
    %87 = vector.extract_strided_slice %79 {offsets = [0, 2], sizes = [4, 1], strides = [1, 1]} : vector<4x10xf32> to vector<4x1xf32>
    %88 = vector.broadcast %87 : vector<4x1xf32> to vector<4x10xf32>
    %89 = arith.mulf %88, %15 : vector<4x10xf32>
    %90 = vector.extract_strided_slice %79 {offsets = [0, 3], sizes = [4, 1], strides = [1, 1]} : vector<4x10xf32> to vector<4x1xf32>
    %91 = vector.broadcast %90 : vector<4x1xf32> to vector<4x10xf32>
    %92 = arith.mulf %91, %18 : vector<4x10xf32>
    %93 = vector.extract_strided_slice %79 {offsets = [0, 4], sizes = [4, 1], strides = [1, 1]} : vector<4x10xf32> to vector<4x1xf32>
    %94 = vector.broadcast %93 : vector<4x1xf32> to vector<4x10xf32>
    %95 = arith.mulf %94, %21 : vector<4x10xf32>
    %96 = vector.extract_strided_slice %79 {offsets = [0, 5], sizes = [4, 1], strides = [1, 1]} : vector<4x10xf32> to vector<4x1xf32>
    %97 = vector.broadcast %96 : vector<4x1xf32> to vector<4x10xf32>
    %98 = arith.mulf %97, %24 : vector<4x10xf32>
    %99 = vector.extract_strided_slice %79 {offsets = [0, 6], sizes = [4, 1], strides = [1, 1]} : vector<4x10xf32> to vector<4x1xf32>
    %100 = vector.broadcast %99 : vector<4x1xf32> to vector<4x10xf32>
    %101 = arith.mulf %100, %27 : vector<4x10xf32>
    %102 = vector.extract_strided_slice %79 {offsets = [0, 7], sizes = [4, 1], strides = [1, 1]} : vector<4x10xf32> to vector<4x1xf32>
    %103 = vector.broadcast %102 : vector<4x1xf32> to vector<4x10xf32>
    %104 = arith.mulf %103, %30 : vector<4x10xf32>
    %105 = vector.extract_strided_slice %79 {offsets = [0, 8], sizes = [4, 1], strides = [1, 1]} : vector<4x10xf32> to vector<4x1xf32>
    %106 = vector.broadcast %105 : vector<4x1xf32> to vector<4x10xf32>
    %107 = arith.mulf %106, %33 : vector<4x10xf32>
    %108 = vector.extract_strided_slice %79 {offsets = [0, 9], sizes = [4, 1], strides = [1, 1]} : vector<4x10xf32> to vector<4x1xf32>
    %109 = vector.broadcast %108 : vector<4x1xf32> to vector<4x10xf32>
    %110 = arith.mulf %109, %36 : vector<4x10xf32>
    %111 = arith.addf %80, %83 : vector<4x10xf32>
    %112 = arith.addf %86, %89 : vector<4x10xf32>
    %113 = arith.addf %92, %95 : vector<4x10xf32>
    %114 = arith.addf %98, %101 : vector<4x10xf32>
    %115 = arith.addf %104, %107 : vector<4x10xf32>
    %116 = arith.addf %111, %112 : vector<4x10xf32>
    %117 = arith.addf %113, %114 : vector<4x10xf32>
    %118 = arith.addf %115, %110 : vector<4x10xf32>
    %119 = arith.addf %116, %117 : vector<4x10xf32>
    %120 = arith.addf %119, %118 : vector<4x10xf32>
    %121 = math.tanh %120 : vector<4x10xf32>
    %122 = vector.extract_strided_slice %5 {offsets = [8, 0], sizes = [4, 10], strides = [1, 1]} : vector<32x10xf32> to vector<4x10xf32>
    %123 = vector.extract_strided_slice %121 {offsets = [0, 0], sizes = [4, 1], strides = [1, 1]} : vector<4x10xf32> to vector<4x1xf32>
    %124 = vector.broadcast %123 : vector<4x1xf32> to vector<4x10xf32>
    %125 = arith.mulf %124, %9 : vector<4x10xf32>
    %126 = vector.extract_strided_slice %121 {offsets = [0, 1], sizes = [4, 1], strides = [1, 1]} : vector<4x10xf32> to vector<4x1xf32>
    %127 = vector.broadcast %126 : vector<4x1xf32> to vector<4x10xf32>
    %128 = arith.mulf %127, %12 : vector<4x10xf32>
    %129 = vector.extract_strided_slice %121 {offsets = [0, 2], sizes = [4, 1], strides = [1, 1]} : vector<4x10xf32> to vector<4x1xf32>
    %130 = vector.broadcast %129 : vector<4x1xf32> to vector<4x10xf32>
    %131 = arith.mulf %130, %15 : vector<4x10xf32>
    %132 = vector.extract_strided_slice %121 {offsets = [0, 3], sizes = [4, 1], strides = [1, 1]} : vector<4x10xf32> to vector<4x1xf32>
    %133 = vector.broadcast %132 : vector<4x1xf32> to vector<4x10xf32>
    %134 = arith.mulf %133, %18 : vector<4x10xf32>
    %135 = vector.extract_strided_slice %121 {offsets = [0, 4], sizes = [4, 1], strides = [1, 1]} : vector<4x10xf32> to vector<4x1xf32>
    %136 = vector.broadcast %135 : vector<4x1xf32> to vector<4x10xf32>
    %137 = arith.mulf %136, %21 : vector<4x10xf32>
    %138 = vector.extract_strided_slice %121 {offsets = [0, 5], sizes = [4, 1], strides = [1, 1]} : vector<4x10xf32> to vector<4x1xf32>
    %139 = vector.broadcast %138 : vector<4x1xf32> to vector<4x10xf32>
    %140 = arith.mulf %139, %24 : vector<4x10xf32>
    %141 = vector.extract_strided_slice %121 {offsets = [0, 6], sizes = [4, 1], strides = [1, 1]} : vector<4x10xf32> to vector<4x1xf32>
    %142 = vector.broadcast %141 : vector<4x1xf32> to vector<4x10xf32>
    %143 = arith.mulf %142, %27 : vector<4x10xf32>
    %144 = vector.extract_strided_slice %121 {offsets = [0, 7], sizes = [4, 1], strides = [1, 1]} : vector<4x10xf32> to vector<4x1xf32>
    %145 = vector.broadcast %144 : vector<4x1xf32> to vector<4x10xf32>
    %146 = arith.mulf %145, %30 : vector<4x10xf32>
    %147 = vector.extract_strided_slice %121 {offsets = [0, 8], sizes = [4, 1], strides = [1, 1]} : vector<4x10xf32> to vector<4x1xf32>
    %148 = vector.broadcast %147 : vector<4x1xf32> to vector<4x10xf32>
    %149 = arith.mulf %148, %33 : vector<4x10xf32>
    %150 = vector.extract_strided_slice %121 {offsets = [0, 9], sizes = [4, 1], strides = [1, 1]} : vector<4x10xf32> to vector<4x1xf32>
    %151 = vector.broadcast %150 : vector<4x1xf32> to vector<4x10xf32>
    %152 = arith.mulf %151, %36 : vector<4x10xf32>
    %153 = arith.addf %122, %125 : vector<4x10xf32>
    %154 = arith.addf %128, %131 : vector<4x10xf32>
    %155 = arith.addf %134, %137 : vector<4x10xf32>
    %156 = arith.addf %140, %143 : vector<4x10xf32>
    %157 = arith.addf %146, %149 : vector<4x10xf32>
    %158 = arith.addf %153, %154 : vector<4x10xf32>
    %159 = arith.addf %155, %156 : vector<4x10xf32>
    %160 = arith.addf %157, %152 : vector<4x10xf32>
    %161 = arith.addf %158, %159 : vector<4x10xf32>
    %162 = arith.addf %161, %160 : vector<4x10xf32>
    %163 = math.tanh %162 : vector<4x10xf32>
    %164 = vector.extract_strided_slice %5 {offsets = [12, 0], sizes = [4, 10], strides = [1, 1]} : vector<32x10xf32> to vector<4x10xf32>
    %165 = vector.extract_strided_slice %163 {offsets = [0, 0], sizes = [4, 1], strides = [1, 1]} : vector<4x10xf32> to vector<4x1xf32>
    %166 = vector.broadcast %165 : vector<4x1xf32> to vector<4x10xf32>
    %167 = arith.mulf %166, %9 : vector<4x10xf32>
    %168 = vector.extract_strided_slice %163 {offsets = [0, 1], sizes = [4, 1], strides = [1, 1]} : vector<4x10xf32> to vector<4x1xf32>
    %169 = vector.broadcast %168 : vector<4x1xf32> to vector<4x10xf32>
    %170 = arith.mulf %169, %12 : vector<4x10xf32>
    %171 = vector.extract_strided_slice %163 {offsets = [0, 2], sizes = [4, 1], strides = [1, 1]} : vector<4x10xf32> to vector<4x1xf32>
    %172 = vector.broadcast %171 : vector<4x1xf32> to vector<4x10xf32>
    %173 = arith.mulf %172, %15 : vector<4x10xf32>
    %174 = vector.extract_strided_slice %163 {offsets = [0, 3], sizes = [4, 1], strides = [1, 1]} : vector<4x10xf32> to vector<4x1xf32>
    %175 = vector.broadcast %174 : vector<4x1xf32> to vector<4x10xf32>
    %176 = arith.mulf %175, %18 : vector<4x10xf32>
    %177 = vector.extract_strided_slice %163 {offsets = [0, 4], sizes = [4, 1], strides = [1, 1]} : vector<4x10xf32> to vector<4x1xf32>
    %178 = vector.broadcast %177 : vector<4x1xf32> to vector<4x10xf32>
    %179 = arith.mulf %178, %21 : vector<4x10xf32>
    %180 = vector.extract_strided_slice %163 {offsets = [0, 5], sizes = [4, 1], strides = [1, 1]} : vector<4x10xf32> to vector<4x1xf32>
    %181 = vector.broadcast %180 : vector<4x1xf32> to vector<4x10xf32>
    %182 = arith.mulf %181, %24 : vector<4x10xf32>
    %183 = vector.extract_strided_slice %163 {offsets = [0, 6], sizes = [4, 1], strides = [1, 1]} : vector<4x10xf32> to vector<4x1xf32>
    %184 = vector.broadcast %183 : vector<4x1xf32> to vector<4x10xf32>
    %185 = arith.mulf %184, %27 : vector<4x10xf32>
    %186 = vector.extract_strided_slice %163 {offsets = [0, 7], sizes = [4, 1], strides = [1, 1]} : vector<4x10xf32> to vector<4x1xf32>
    %187 = vector.broadcast %186 : vector<4x1xf32> to vector<4x10xf32>
    %188 = arith.mulf %187, %30 : vector<4x10xf32>
    %189 = vector.extract_strided_slice %163 {offsets = [0, 8], sizes = [4, 1], strides = [1, 1]} : vector<4x10xf32> to vector<4x1xf32>
    %190 = vector.broadcast %189 : vector<4x1xf32> to vector<4x10xf32>
    %191 = arith.mulf %190, %33 : vector<4x10xf32>
    %192 = vector.extract_strided_slice %163 {offsets = [0, 9], sizes = [4, 1], strides = [1, 1]} : vector<4x10xf32> to vector<4x1xf32>
    %193 = vector.broadcast %192 : vector<4x1xf32> to vector<4x10xf32>
    %194 = arith.mulf %193, %36 : vector<4x10xf32>
    %195 = arith.addf %164, %167 : vector<4x10xf32>
    %196 = arith.addf %170, %173 : vector<4x10xf32>
    %197 = arith.addf %176, %179 : vector<4x10xf32>
    %198 = arith.addf %182, %185 : vector<4x10xf32>
    %199 = arith.addf %188, %191 : vector<4x10xf32>
    %200 = arith.addf %195, %196 : vector<4x10xf32>
    %201 = arith.addf %197, %198 : vector<4x10xf32>
    %202 = arith.addf %199, %194 : vector<4x10xf32>
    %203 = arith.addf %200, %201 : vector<4x10xf32>
    %204 = arith.addf %203, %202 : vector<4x10xf32>
    %205 = math.tanh %204 : vector<4x10xf32>
    %206 = vector.extract_strided_slice %5 {offsets = [16, 0], sizes = [4, 10], strides = [1, 1]} : vector<32x10xf32> to vector<4x10xf32>
    %207 = vector.extract_strided_slice %205 {offsets = [0, 0], sizes = [4, 1], strides = [1, 1]} : vector<4x10xf32> to vector<4x1xf32>
    %208 = vector.broadcast %207 : vector<4x1xf32> to vector<4x10xf32>
    %209 = arith.mulf %208, %9 : vector<4x10xf32>
    %210 = vector.extract_strided_slice %205 {offsets = [0, 1], sizes = [4, 1], strides = [1, 1]} : vector<4x10xf32> to vector<4x1xf32>
    %211 = vector.broadcast %210 : vector<4x1xf32> to vector<4x10xf32>
    %212 = arith.mulf %211, %12 : vector<4x10xf32>
    %213 = vector.extract_strided_slice %205 {offsets = [0, 2], sizes = [4, 1], strides = [1, 1]} : vector<4x10xf32> to vector<4x1xf32>
    %214 = vector.broadcast %213 : vector<4x1xf32> to vector<4x10xf32>
    %215 = arith.mulf %214, %15 : vector<4x10xf32>
    %216 = vector.extract_strided_slice %205 {offsets = [0, 3], sizes = [4, 1], strides = [1, 1]} : vector<4x10xf32> to vector<4x1xf32>
    %217 = vector.broadcast %216 : vector<4x1xf32> to vector<4x10xf32>
    %218 = arith.mulf %217, %18 : vector<4x10xf32>
    %219 = vector.extract_strided_slice %205 {offsets = [0, 4], sizes = [4, 1], strides = [1, 1]} : vector<4x10xf32> to vector<4x1xf32>
    %220 = vector.broadcast %219 : vector<4x1xf32> to vector<4x10xf32>
    %221 = arith.mulf %220, %21 : vector<4x10xf32>
    %222 = vector.extract_strided_slice %205 {offsets = [0, 5], sizes = [4, 1], strides = [1, 1]} : vector<4x10xf32> to vector<4x1xf32>
    %223 = vector.broadcast %222 : vector<4x1xf32> to vector<4x10xf32>
    %224 = arith.mulf %223, %24 : vector<4x10xf32>
    %225 = vector.extract_strided_slice %205 {offsets = [0, 6], sizes = [4, 1], strides = [1, 1]} : vector<4x10xf32> to vector<4x1xf32>
    %226 = vector.broadcast %225 : vector<4x1xf32> to vector<4x10xf32>
    %227 = arith.mulf %226, %27 : vector<4x10xf32>
    %228 = vector.extract_strided_slice %205 {offsets = [0, 7], sizes = [4, 1], strides = [1, 1]} : vector<4x10xf32> to vector<4x1xf32>
    %229 = vector.broadcast %228 : vector<4x1xf32> to vector<4x10xf32>
    %230 = arith.mulf %229, %30 : vector<4x10xf32>
    %231 = vector.extract_strided_slice %205 {offsets = [0, 8], sizes = [4, 1], strides = [1, 1]} : vector<4x10xf32> to vector<4x1xf32>
    %232 = vector.broadcast %231 : vector<4x1xf32> to vector<4x10xf32>
    %233 = arith.mulf %232, %33 : vector<4x10xf32>
    %234 = vector.extract_strided_slice %205 {offsets = [0, 9], sizes = [4, 1], strides = [1, 1]} : vector<4x10xf32> to vector<4x1xf32>
    %235 = vector.broadcast %234 : vector<4x1xf32> to vector<4x10xf32>
    %236 = arith.mulf %235, %36 : vector<4x10xf32>
    %237 = arith.addf %206, %209 : vector<4x10xf32>
    %238 = arith.addf %212, %215 : vector<4x10xf32>
    %239 = arith.addf %218, %221 : vector<4x10xf32>
    %240 = arith.addf %224, %227 : vector<4x10xf32>
    %241 = arith.addf %230, %233 : vector<4x10xf32>
    %242 = arith.addf %237, %238 : vector<4x10xf32>
    %243 = arith.addf %239, %240 : vector<4x10xf32>
    %244 = arith.addf %241, %236 : vector<4x10xf32>
    %245 = arith.addf %242, %243 : vector<4x10xf32>
    %246 = arith.addf %245, %244 : vector<4x10xf32>
    %247 = math.tanh %246 : vector<4x10xf32>
    %248 = vector.extract_strided_slice %5 {offsets = [20, 0], sizes = [4, 10], strides = [1, 1]} : vector<32x10xf32> to vector<4x10xf32>
    %249 = vector.extract_strided_slice %247 {offsets = [0, 0], sizes = [4, 1], strides = [1, 1]} : vector<4x10xf32> to vector<4x1xf32>
    %250 = vector.broadcast %249 : vector<4x1xf32> to vector<4x10xf32>
    %251 = arith.mulf %250, %9 : vector<4x10xf32>
    %252 = vector.extract_strided_slice %247 {offsets = [0, 1], sizes = [4, 1], strides = [1, 1]} : vector<4x10xf32> to vector<4x1xf32>
    %253 = vector.broadcast %252 : vector<4x1xf32> to vector<4x10xf32>
    %254 = arith.mulf %253, %12 : vector<4x10xf32>
    %255 = vector.extract_strided_slice %247 {offsets = [0, 2], sizes = [4, 1], strides = [1, 1]} : vector<4x10xf32> to vector<4x1xf32>
    %256 = vector.broadcast %255 : vector<4x1xf32> to vector<4x10xf32>
    %257 = arith.mulf %256, %15 : vector<4x10xf32>
    %258 = vector.extract_strided_slice %247 {offsets = [0, 3], sizes = [4, 1], strides = [1, 1]} : vector<4x10xf32> to vector<4x1xf32>
    %259 = vector.broadcast %258 : vector<4x1xf32> to vector<4x10xf32>
    %260 = arith.mulf %259, %18 : vector<4x10xf32>
    %261 = vector.extract_strided_slice %247 {offsets = [0, 4], sizes = [4, 1], strides = [1, 1]} : vector<4x10xf32> to vector<4x1xf32>
    %262 = vector.broadcast %261 : vector<4x1xf32> to vector<4x10xf32>
    %263 = arith.mulf %262, %21 : vector<4x10xf32>
    %264 = vector.extract_strided_slice %247 {offsets = [0, 5], sizes = [4, 1], strides = [1, 1]} : vector<4x10xf32> to vector<4x1xf32>
    %265 = vector.broadcast %264 : vector<4x1xf32> to vector<4x10xf32>
    %266 = arith.mulf %265, %24 : vector<4x10xf32>
    %267 = vector.extract_strided_slice %247 {offsets = [0, 6], sizes = [4, 1], strides = [1, 1]} : vector<4x10xf32> to vector<4x1xf32>
    %268 = vector.broadcast %267 : vector<4x1xf32> to vector<4x10xf32>
    %269 = arith.mulf %268, %27 : vector<4x10xf32>
    %270 = vector.extract_strided_slice %247 {offsets = [0, 7], sizes = [4, 1], strides = [1, 1]} : vector<4x10xf32> to vector<4x1xf32>
    %271 = vector.broadcast %270 : vector<4x1xf32> to vector<4x10xf32>
    %272 = arith.mulf %271, %30 : vector<4x10xf32>
    %273 = vector.extract_strided_slice %247 {offsets = [0, 8], sizes = [4, 1], strides = [1, 1]} : vector<4x10xf32> to vector<4x1xf32>
    %274 = vector.broadcast %273 : vector<4x1xf32> to vector<4x10xf32>
    %275 = arith.mulf %274, %33 : vector<4x10xf32>
    %276 = vector.extract_strided_slice %247 {offsets = [0, 9], sizes = [4, 1], strides = [1, 1]} : vector<4x10xf32> to vector<4x1xf32>
    %277 = vector.broadcast %276 : vector<4x1xf32> to vector<4x10xf32>
    %278 = arith.mulf %277, %36 : vector<4x10xf32>
    %279 = arith.addf %248, %251 : vector<4x10xf32>
    %280 = arith.addf %254, %257 : vector<4x10xf32>
    %281 = arith.addf %260, %263 : vector<4x10xf32>
    %282 = arith.addf %266, %269 : vector<4x10xf32>
    %283 = arith.addf %272, %275 : vector<4x10xf32>
    %284 = arith.addf %279, %280 : vector<4x10xf32>
    %285 = arith.addf %281, %282 : vector<4x10xf32>
    %286 = arith.addf %283, %278 : vector<4x10xf32>
    %287 = arith.addf %284, %285 : vector<4x10xf32>
    %288 = arith.addf %287, %286 : vector<4x10xf32>
    %289 = math.tanh %288 : vector<4x10xf32>
    %290 = vector.extract_strided_slice %5 {offsets = [24, 0], sizes = [4, 10], strides = [1, 1]} : vector<32x10xf32> to vector<4x10xf32>
    %291 = vector.extract_strided_slice %289 {offsets = [0, 0], sizes = [4, 1], strides = [1, 1]} : vector<4x10xf32> to vector<4x1xf32>
    %292 = vector.broadcast %291 : vector<4x1xf32> to vector<4x10xf32>
    %293 = arith.mulf %292, %9 : vector<4x10xf32>
    %294 = vector.extract_strided_slice %289 {offsets = [0, 1], sizes = [4, 1], strides = [1, 1]} : vector<4x10xf32> to vector<4x1xf32>
    %295 = vector.broadcast %294 : vector<4x1xf32> to vector<4x10xf32>
    %296 = arith.mulf %295, %12 : vector<4x10xf32>
    %297 = vector.extract_strided_slice %289 {offsets = [0, 2], sizes = [4, 1], strides = [1, 1]} : vector<4x10xf32> to vector<4x1xf32>
    %298 = vector.broadcast %297 : vector<4x1xf32> to vector<4x10xf32>
    %299 = arith.mulf %298, %15 : vector<4x10xf32>
    %300 = vector.extract_strided_slice %289 {offsets = [0, 3], sizes = [4, 1], strides = [1, 1]} : vector<4x10xf32> to vector<4x1xf32>
    %301 = vector.broadcast %300 : vector<4x1xf32> to vector<4x10xf32>
    %302 = arith.mulf %301, %18 : vector<4x10xf32>
    %303 = vector.extract_strided_slice %289 {offsets = [0, 4], sizes = [4, 1], strides = [1, 1]} : vector<4x10xf32> to vector<4x1xf32>
    %304 = vector.broadcast %303 : vector<4x1xf32> to vector<4x10xf32>
    %305 = arith.mulf %304, %21 : vector<4x10xf32>
    %306 = vector.extract_strided_slice %289 {offsets = [0, 5], sizes = [4, 1], strides = [1, 1]} : vector<4x10xf32> to vector<4x1xf32>
    %307 = vector.broadcast %306 : vector<4x1xf32> to vector<4x10xf32>
    %308 = arith.mulf %307, %24 : vector<4x10xf32>
    %309 = vector.extract_strided_slice %289 {offsets = [0, 6], sizes = [4, 1], strides = [1, 1]} : vector<4x10xf32> to vector<4x1xf32>
    %310 = vector.broadcast %309 : vector<4x1xf32> to vector<4x10xf32>
    %311 = arith.mulf %310, %27 : vector<4x10xf32>
    %312 = vector.extract_strided_slice %289 {offsets = [0, 7], sizes = [4, 1], strides = [1, 1]} : vector<4x10xf32> to vector<4x1xf32>
    %313 = vector.broadcast %312 : vector<4x1xf32> to vector<4x10xf32>
    %314 = arith.mulf %313, %30 : vector<4x10xf32>
    %315 = vector.extract_strided_slice %289 {offsets = [0, 8], sizes = [4, 1], strides = [1, 1]} : vector<4x10xf32> to vector<4x1xf32>
    %316 = vector.broadcast %315 : vector<4x1xf32> to vector<4x10xf32>
    %317 = arith.mulf %316, %33 : vector<4x10xf32>
    %318 = vector.extract_strided_slice %289 {offsets = [0, 9], sizes = [4, 1], strides = [1, 1]} : vector<4x10xf32> to vector<4x1xf32>
    %319 = vector.broadcast %318 : vector<4x1xf32> to vector<4x10xf32>
    %320 = arith.mulf %319, %36 : vector<4x10xf32>
    %321 = arith.addf %290, %293 : vector<4x10xf32>
    %322 = arith.addf %296, %299 : vector<4x10xf32>
    %323 = arith.addf %302, %305 : vector<4x10xf32>
    %324 = arith.addf %308, %311 : vector<4x10xf32>
    %325 = arith.addf %314, %317 : vector<4x10xf32>
    %326 = arith.addf %321, %322 : vector<4x10xf32>
    %327 = arith.addf %323, %324 : vector<4x10xf32>
    %328 = arith.addf %325, %320 : vector<4x10xf32>
    %329 = arith.addf %326, %327 : vector<4x10xf32>
    %330 = arith.addf %329, %328 : vector<4x10xf32>
    %331 = math.tanh %330 : vector<4x10xf32>
    %332 = vector.extract_strided_slice %5 {offsets = [28, 0], sizes = [4, 10], strides = [1, 1]} : vector<32x10xf32> to vector<4x10xf32>
    %333 = vector.extract_strided_slice %331 {offsets = [0, 0], sizes = [4, 1], strides = [1, 1]} : vector<4x10xf32> to vector<4x1xf32>
    %334 = vector.broadcast %333 : vector<4x1xf32> to vector<4x10xf32>
    %335 = arith.mulf %334, %9 : vector<4x10xf32>
    %336 = vector.extract_strided_slice %331 {offsets = [0, 1], sizes = [4, 1], strides = [1, 1]} : vector<4x10xf32> to vector<4x1xf32>
    %337 = vector.broadcast %336 : vector<4x1xf32> to vector<4x10xf32>
    %338 = arith.mulf %337, %12 : vector<4x10xf32>
    %339 = vector.extract_strided_slice %331 {offsets = [0, 2], sizes = [4, 1], strides = [1, 1]} : vector<4x10xf32> to vector<4x1xf32>
    %340 = vector.broadcast %339 : vector<4x1xf32> to vector<4x10xf32>
    %341 = arith.mulf %340, %15 : vector<4x10xf32>
    %342 = vector.extract_strided_slice %331 {offsets = [0, 3], sizes = [4, 1], strides = [1, 1]} : vector<4x10xf32> to vector<4x1xf32>
    %343 = vector.broadcast %342 : vector<4x1xf32> to vector<4x10xf32>
    %344 = arith.mulf %343, %18 : vector<4x10xf32>
    %345 = vector.extract_strided_slice %331 {offsets = [0, 4], sizes = [4, 1], strides = [1, 1]} : vector<4x10xf32> to vector<4x1xf32>
    %346 = vector.broadcast %345 : vector<4x1xf32> to vector<4x10xf32>
    %347 = arith.mulf %346, %21 : vector<4x10xf32>
    %348 = vector.extract_strided_slice %331 {offsets = [0, 5], sizes = [4, 1], strides = [1, 1]} : vector<4x10xf32> to vector<4x1xf32>
    %349 = vector.broadcast %348 : vector<4x1xf32> to vector<4x10xf32>
    %350 = arith.mulf %349, %24 : vector<4x10xf32>
    %351 = vector.extract_strided_slice %331 {offsets = [0, 6], sizes = [4, 1], strides = [1, 1]} : vector<4x10xf32> to vector<4x1xf32>
    %352 = vector.broadcast %351 : vector<4x1xf32> to vector<4x10xf32>
    %353 = arith.mulf %352, %27 : vector<4x10xf32>
    %354 = vector.extract_strided_slice %331 {offsets = [0, 7], sizes = [4, 1], strides = [1, 1]} : vector<4x10xf32> to vector<4x1xf32>
    %355 = vector.broadcast %354 : vector<4x1xf32> to vector<4x10xf32>
    %356 = arith.mulf %355, %30 : vector<4x10xf32>
    %357 = vector.extract_strided_slice %331 {offsets = [0, 8], sizes = [4, 1], strides = [1, 1]} : vector<4x10xf32> to vector<4x1xf32>
    %358 = vector.broadcast %357 : vector<4x1xf32> to vector<4x10xf32>
    %359 = arith.mulf %358, %33 : vector<4x10xf32>
    %360 = vector.extract_strided_slice %331 {offsets = [0, 9], sizes = [4, 1], strides = [1, 1]} : vector<4x10xf32> to vector<4x1xf32>
    %361 = vector.broadcast %360 : vector<4x1xf32> to vector<4x10xf32>
    %362 = arith.mulf %361, %36 : vector<4x10xf32>
    %363 = arith.addf %332, %335 : vector<4x10xf32>
    %364 = arith.addf %338, %341 : vector<4x10xf32>
    %365 = arith.addf %344, %347 : vector<4x10xf32>
    %366 = arith.addf %350, %353 : vector<4x10xf32>
    %367 = arith.addf %356, %359 : vector<4x10xf32>
    %368 = arith.addf %363, %364 : vector<4x10xf32>
    %369 = arith.addf %365, %366 : vector<4x10xf32>
    %370 = arith.addf %367, %362 : vector<4x10xf32>
    %371 = arith.addf %368, %369 : vector<4x10xf32>
    %372 = arith.addf %371, %370 : vector<4x10xf32>
    %373 = math.tanh %372 : vector<4x10xf32>
    %374 = tpu.concatenate %79, %121, %163, %205, %247, %289, %331, %373 in 0 : vector<4x10xf32>, vector<4x10xf32>, vector<4x10xf32>, vector<4x10xf32>, vector<4x10xf32>, vector<4x10xf32>, vector<4x10xf32>, vector<4x10xf32> -> vector<32x10xf32>
    %c0_8 = arith.constant 0 : index
    %c0_9 = arith.constant 0 : index
    %375 = vector.load %arg5[%c0_8, %c0_9] : memref<10x3xf32, #tpu.memory_space<vmem>>, vector<10x3xf32>
    %cst_10 = arith.constant dense<0.000000e+00> : vector<32x3xf32>
    %376 = tpu.matmul %374, %375, %cst_10 {dimension_numbers = #tpu.dot_dimension_numbers<[1], [0], [0], [1], [0, 0, 1, 1], [], []>} : vector<32x10xf32>, vector<10x3xf32>, vector<32x3xf32> -> vector<32x3xf32>
    %c0_11 = arith.constant 0 : index
    %c0_12 = arith.constant 0 : index
    %377 = vector.load %arg6[%c0_11, %c0_12] : memref<1x3xf32, #tpu.memory_space<vmem>>, vector<1x3xf32>
    %378 = vector.broadcast %377 : vector<1x3xf32> to vector<32x3xf32>
    %379 = arith.addf %376, %378 : vector<32x3xf32>
    %380 = arith.negf %379 : vector<32x3xf32>
    %381 = math.exp %380 : vector<32x3xf32>
    %cst_13 = arith.constant 1.000000e+00 : f32
    %382 = vector.broadcast %cst_13 : f32 to vector<32x3xf32>
    %383 = arith.addf %382, %381 : vector<32x3xf32>
    %384 = arith.divf %382, %383 : vector<32x3xf32>
    %c0_14 = arith.constant 0 : index
    %c0_15 = arith.constant 0 : index
    %385 = vector.load %arg7[%c0_14, %c0_15] : memref<32x3xf32, #tpu.memory_space<vmem>>, vector<32x3xf32>
    tpu.vector_store %arg7[%c0_14, %c0_15], %384 {strides = array<i32>} : memref<32x3xf32, #tpu.memory_space<vmem>>, vector<32x3xf32>,
    return
  }
  func.func @transform_0(%arg0: i32) -> (i32, i32) {
    %c0_i32 = arith.constant 0 : i32
    %c0_i32_0 = arith.constant 0 : i32
    %c0_i32_1 = arith.constant 0 : i32
    return %c0_i32, %c0_i32_0 : i32, i32
  }
  func.func @transform_1(%arg0: i32) -> (i32, i32) {
    %c0_i32 = arith.constant 0 : i32
    %c0_i32_0 = arith.constant 0 : i32
    %c0_i32_1 = arith.constant 0 : i32
    return %c0_i32, %c0_i32_0 : i32, i32
  }
  func.func @transform_2(%arg0: i32) -> (i32, i32) {
    %c0_i32 = arith.constant 0 : i32
    %c0_i32_0 = arith.constant 0 : i32
    %c0_i32_1 = arith.constant 0 : i32
    return %c0_i32, %c0_i32_0 : i32, i32
  }
  func.func @transform_3(%arg0: i32) -> (i32, i32) {
    %c0_i32 = arith.constant 0 : i32
    %c0_i32_0 = arith.constant 0 : i32
    %c0_i32_1 = arith.constant 0 : i32
    return %c0_i32, %c0_i32_0 : i32, i32
  }
  func.func @transform_4(%arg0: i32) -> (i32, i32) {
    %c0_i32 = arith.constant 0 : i32
    %c0_i32_0 = arith.constant 0 : i32
    %c0_i32_1 = arith.constant 0 : i32
    return %c0_i32, %c0_i32_0 : i32, i32
  }
  func.func @transform_5(%arg0: i32) -> (i32, i32) {
    %c0_i32 = arith.constant 0 : i32
    %c0_i32_0 = arith.constant 0 : i32
    %c0_i32_1 = arith.constant 0 : i32
    return %c0_i32, %c0_i32_0 : i32, i32
  }
  func.func @transform_6(%arg0: i32) -> (i32, i32) {
    %c0_i32 = arith.constant 0 : i32
    %c0_i32_0 = arith.constant 0 : i32
    %c0_i32_1 = arith.constant 0 : i32
    return %c0_i32, %c0_i32_0 : i32, i32
  }
}

</mosaic_0001>

<llo_original>
// kernel: causal_rnn_forward.1
$region0: #{causal_rnn_forward.1}
  #allocation0 [shape = 'u32[]', space=smem, size = 0x4, offset = 0x4, fixed_abs, tag = 'smem constant byte address 0x4 - core index']
  #allocation1 [shape = 'u32[144,128]{1,0:T(1,128)}', space=vmem, size = 0x12000, scoped, tag = 'internal scratch']
  %s0 = inlined_call_operand.vmem [shape: f32[32,124], index: 0, kind: input, shape index: {}]
  %s1 = inlined_call_operand.vmem [shape: f32[124,10], index: 1, kind: input, shape index: {}]
  %s2 = inlined_call_operand.vmem [shape: f32[1,10], index: 2, kind: input, shape index: {}]
  %s3 = inlined_call_operand.vmem [shape: f32[10,10], index: 3, kind: input, shape index: {}]
  %s4 = inlined_call_operand.vmem [shape: f32[10,3], index: 4, kind: input, shape index: {}]
  %s5 = inlined_call_operand.vmem [shape: f32[1,3], index: 5, kind: input, shape index: {}]
  %s6 = inlined_call_operand.vmem [shape: f32[32,3], index: 6, kind: output, shape index: {}]
  %s7 = sld [smem:[#allocation0]]
  $region34: #{causal_rnn_forward.1} parent=0
    _
  %s9 = ssub.s32 1, %s7
  %s10 = scalar_select 0, %s9, %s7
  // Predicated region
  $region2: #{causal_rnn_forward.1} parent=0 // pred_check
    _
  $region3: #{causal_rnn_forward.1} parent=0 // pred_check_branch
    %12 = sbr.rel (0) target = $region5
  $region4: #{causal_rnn_forward.1} parent=0 // pred_region
    _
  $region5: #{causal_rnn_forward.1} parent=0 // pred_fallthru
    _
  // Predicated region
  $region6: #{causal_rnn_forward.1} parent=0 // pred_check
    _
  $region7: #{causal_rnn_forward.1} parent=0 // pred_check_branch
    %14 = sbr.rel (0) target = $region9
  $region8: #{causal_rnn_forward.1} parent=0 // pred_region
    _
  $region9: #{causal_rnn_forward.1} parent=0 // pred_fallthru
    _
  // Predicated region
  $region10: #{causal_rnn_forward.1} parent=0 // pred_check
    _
  $region11: #{causal_rnn_forward.1} parent=0 // pred_check_branch
    %16 = sbr.rel (0) target = $region13
  $region12: #{causal_rnn_forward.1} parent=0 // pred_region
    _
  $region13: #{causal_rnn_forward.1} parent=0 // pred_fallthru
    _
  // Predicated region
  $region14: #{causal_rnn_forward.1} parent=0 // pred_check
    _
  $region15: #{causal_rnn_forward.1} parent=0 // pred_check_branch
    %18 = sbr.rel (0) target = $region17
  $region16: #{causal_rnn_forward.1} parent=0 // pred_region
    _
  $region17: #{causal_rnn_forward.1} parent=0 // pred_fallthru
    _
  // Predicated region
  $region18: #{causal_rnn_forward.1} parent=0 // pred_check
    _
  $region19: #{causal_rnn_forward.1} parent=0 // pred_check_branch
    %20 = sbr.rel (0) target = $region21
  $region20: #{causal_rnn_forward.1} parent=0 // pred_region
    _
  $region21: #{causal_rnn_forward.1} parent=0 // pred_fallthru
    _
  // Predicated region
  $region22: #{causal_rnn_forward.1} parent=0 // pred_check
    _
  $region23: #{causal_rnn_forward.1} parent=0 // pred_check_branch
    %22 = sbr.rel (0) target = $region25
  $region24: #{causal_rnn_forward.1} parent=0 // pred_region
    _
  $region25: #{causal_rnn_forward.1} parent=0 // pred_fallthru
    _
  %v23 = vld [vmem:[%s0] sm:$0xff]
  %v24 = vld [vmem:[%s0 + $0x8] sm:$0xff]
  %v25 = vld [vmem:[%s0 + $0x10] sm:$0xff]
  %v26 = vld [vmem:[%s0 + $0x18] sm:$0xff]
  %v27 = vld [vmem:[%s1] sm:$0xff]
  %v28 = vld [vmem:[%s1 + $0x8] sm:$0xff]
  %v29 = vld [vmem:[%s1 + $0x10] sm:$0xff]
  %v30 = vld [vmem:[%s1 + $0x18] sm:$0xff]
  %v31 = vld [vmem:[%s1 + $0x20] sm:$0xff]
  %v32 = vld [vmem:[%s1 + $0x28] sm:$0xff]
  %v33 = vld [vmem:[%s1 + $0x30] sm:$0xff]
  %v34 = vld [vmem:[%s1 + $0x38] sm:$0xff]
  %v35 = vld [vmem:[%s1 + $0x40] sm:$0xff]
  %v36 = vld [vmem:[%s1 + $0x48] sm:$0xff]
  %v37 = vld [vmem:[%s1 + $0x50] sm:$0xff]
  %v38 = vld [vmem:[%s1 + $0x58] sm:$0xff]
  %v39 = vld [vmem:[%s1 + $0x60] sm:$0xff]
  %v40 = vld [vmem:[%s1 + $0x68] sm:$0xff]
  %v41 = vld [vmem:[%s1 + $0x70] sm:$0xff]
  %v42 = vld [vmem:[%s1 + $0x78] sm:$0xf]
  %v43 = vld [vmem:[%s2] sm:$0x1]
  %v45 = vlaneseq
  %v46 = vshrl.u32 %v45, 7
  %v47 = vsub.s32 0, %v46
  %v48 = vrot.slane %v43, %v47
  %vm50 = vcmask 1014784
  %v52 = vsel %vm50, %v23, 0
  %v55 = vsel %vm50, %v24, 0
  %v58 = vsel %vm50, %v25, 0
  %v61 = vsel %vm50, %v26, 0
  %vm63 = vcmask 1043456
  %v65 = vsel %vm63, %v42, 0
  %67 = vmatprep.subr.mxu0 0.0
  %68 = vmatpush1.msra.mxu0 %v27
  %69 = vmatprep.subr.mxu0 0.0
  %70 = vmatpush1.msra.mxu0 %v28
  %71 = vmatprep.subr.mxu0 0.0
  %72 = vmatpush1.msra.mxu0 %v29
  %73 = vmatprep.subr.mxu0 0.0
  %74 = vmatpush1.msra.mxu0 %v30
  %75 = vmatprep.subr.mxu0 0.0
  %76 = vmatpush1.msra.mxu0 %v31
  %77 = vmatprep.subr.mxu0 0.0
  %78 = vmatpush1.msra.mxu0 %v32
  %79 = vmatprep.subr.mxu0 0.0
  %80 = vmatpush1.msra.mxu0 %v33
  %81 = vmatprep.subr.mxu0 0.0
  %82 = vmatpush1.msra.mxu0 %v34
  %83 = vmatprep.subr.mxu0 0.0
  %84 = vmatpush1.msra.mxu0 %v35
  %85 = vmatprep.subr.mxu0 0.0
  %86 = vmatpush1.msra.mxu0 %v36
  %87 = vmatprep.subr.mxu0 0.0
  %88 = vmatpush1.msra.mxu0 %v37
  %89 = vmatprep.subr.mxu0 0.0
  %90 = vmatpush1.msra.mxu0 %v38
  %91 = vmatprep.subr.mxu0 0.0
  %92 = vmatpush1.msra.mxu0 %v39
  %93 = vmatprep.subr.mxu0 0.0
  %94 = vmatpush1.msra.mxu0 %v40
  %95 = vmatprep.subr.mxu0 0.0
  %96 = vmatpush1.msra.mxu0 %v41
  %97 = vmatprep.subr.mxu0 0.0
  %98 = vmatpush1.msra.mxu0 %v65
  %99 = vmatprep.subr.mxu0 0.0
  %100 = vmatpush1.msra.mxu0 0.0
  %101 = vmatprep.subr.mxu0 0.0
  %102 = vmatpush1.msra.mxu0 0.0
  %103 = vmatprep.subr.mxu0 0.0
  %104 = vmatpush1.msra.mxu0 0.0
  %105 = vmatprep.subr.mxu0 0.0
  %106 = vmatpush1.msra.mxu0 0.0
  %107 = vmatprep.subr.mxu0 0.0
  %108 = vmatpush1.msra.mxu0 0.0
  %109 = vmatprep.subr.mxu0 0.0
  %110 = vmatpush1.msra.mxu0 0.0
  %111 = vmatprep.subr.mxu0 0.0
  %112 = vmatpush1.msra.mxu0 0.0
  %113 = vmatprep.subr.mxu0 0.0
  %114 = vmatpush1.msra.mxu0 0.0
  %115 = vmatprep.subr.mxu0 0.0
  %116 = vmatpush1.msra.mxu0 0.0
  %117 = vmatprep.subr.mxu0 0.0
  %118 = vmatpush1.msra.mxu0 0.0
  %119 = vmatprep.subr.mxu0 0.0
  %120 = vmatpush1.msra.mxu0 0.0
  %121 = vmatprep.subr.mxu0 0.0
  %122 = vmatpush1.msra.mxu0 0.0
  %123 = vmatprep.subr.mxu0 0.0
  %124 = vmatpush1.msra.mxu0 0.0
  %125 = vmatprep.subr.mxu0 0.0
  %126 = vmatpush1.msra.mxu0 0.0
  %127 = vmatprep.subr.mxu0 0.0
  %128 = vmatpush1.msra.mxu0 0.0
  %129 = vmatprep.subr.mxu0 0.0
  %130 = vmatpush1.msra.mxu0 0.0
  %131 = vmatprep.mubr.f32.mxu0 0.0
  %132 = vmatmul.mubr.f32.gmra.mrb[0].mxu0 %v52
  %v133 = vpop.f32.mrb[0].mxu0
  %v134 = vadd.f32 %v48, %v133
  %v135 = vpop.f32.mrb[0].mxu0
  %136 = vmatprep.mubr.f32.mxu0 0.0
  %137 = vmatmul.mubr.f32.gmra.mrb[0].mxu0 %v55
  %v138 = vpop.f32.mrb[0].mxu0
  %v139 = vadd.f32 %v48, %v138
  %v140 = vpop.f32.mrb[0].mxu0
  %141 = vmatprep.mubr.f32.mxu0 0.0
  %142 = vmatmul.mubr.f32.gmra.mrb[0].mxu0 %v58
  %v143 = vpop.f32.mrb[0].mxu0
  %v144 = vadd.f32 %v48, %v143
  %v145 = vpop.f32.mrb[0].mxu0
  %146 = vmatprep.mubr.f32.mxu0 0.0
  %147 = vmatmul.mubr.f32.gmra.mrb[0].mxu0 %v61
  %v148 = vpop.f32.mrb[0].mxu0
  %v149 = vadd.f32 %v48, %v148
  %v150 = vpop.f32.mrb[0].mxu0
  %151 = vdwg.mxu0
  %v152 = vld [vmem:[%s3] sm:$0xff]
  %v153 = vld [vmem:[%s3 + $0x8] sm:$0x3]
  %v154 = vlaneseq
  %v155 = vshrl.u32 %v154, 7
  %v156 = vsub.s32 0, %v155
  %v157 = vrot.slane %v152, %v156
  %v158 = vlaneseq
  %v159 = vshrl.u32 %v158, 7
  %v160 = vsub.s32 1, %v159
  %v161 = vrot.slane %v152, %v160
  %v162 = vlaneseq
  %v163 = vshrl.u32 %v162, 7
  %v164 = vsub.s32 2, %v163
  %v165 = vrot.slane %v152, %v164
  %v166 = vlaneseq
  %v167 = vshrl.u32 %v166, 7
  %v168 = vsub.s32 3, %v167
  %v169 = vrot.slane %v152, %v168
  %v170 = vlaneseq
  %v171 = vshrl.u32 %v170, 7
  %v172 = vsub.s32 4, %v171
  %v173 = vrot.slane %v152, %v172
  %v174 = vlaneseq
  %v175 = vshrl.u32 %v174, 7
  %v176 = vsub.s32 5, %v175
  %v177 = vrot.slane %v152, %v176
  %v178 = vlaneseq
  %v179 = vshrl.u32 %v178, 7
  %v180 = vsub.s32 6, %v179
  %v181 = vrot.slane %v152, %v180
  %v182 = vlaneseq
  %v183 = vshrl.u32 %v182, 7
  %v184 = vsub.s32 7, %v183
  %v185 = vrot.slane %v152, %v184
  %v186 = vlaneseq
  %v187 = vshrl.u32 %v186, 7
  %v188 = vsub.s32 0, %v187
  %v189 = vrot.slane %v153, %v188
  %v190 = vlaneseq
  %v191 = vshrl.u32 %v190, 7
  %v192 = vsub.s32 1, %v191
  %v193 = vrot.slane %v153, %v192
  %v194 = vmul.f32 %v157, 0.0
  %v195 = vmul.f32 %v161, 0.0
  %v196 = vmul.f32 %v165, 0.0
  %v197 = vmul.f32 %v169, 0.0
  %v198 = vmul.f32 %v173, 0.0
  %v199 = vmul.f32 %v177, 0.0
  %v200 = vmul.f32 %v181, 0.0
  %v201 = vmul.f32 %v185, 0.0
  %v202 = vmul.f32 %v189, 0.0
  %v203 = vmul.f32 %v193, 0.0
  %v204 = vadd.f32 %v134, %v194
  %v205 = vadd.f32 %v195, %v196
  %v206 = vadd.f32 %v197, %v198
  %v207 = vadd.f32 %v199, %v200
  %v208 = vadd.f32 %v201, %v202
  %v209 = vadd.f32 %v204, %v205
  %v210 = vadd.f32 %v206, %v207
  %v211 = vadd.f32 %v208, %v203
  %v212 = vadd.f32 %v209, %v210
  %v213 = vadd.f32 %v212, %v211
  %v214 = vtanh.pop %v213
  %216 = vset.pattern.permute.xlu0 0
  %217 = vperm.xlu0 %216, %v214
  %v218 = vpop.permute.xlu0 %217
  %v220 = vmul.f32 %v218, %v157
  %221 = vset.pattern.permute.xlu0 1
  %222 = vperm.xlu0 %221, %v214
  %v223 = vpop.permute.xlu0 %222
  %v225 = vmul.f32 %v223, %v161
  %226 = vset.pattern.permute.xlu0 2
  %227 = vperm.xlu0 %226, %v214
  %v228 = vpop.permute.xlu0 %227
  %v230 = vmul.f32 %v228, %v165
  %231 = vset.pattern.permute.xlu0 3
  %232 = vperm.xlu0 %231, %v214
  %v233 = vpop.permute.xlu0 %232
  %v235 = vmul.f32 %v233, %v169
  %236 = vset.pattern.permute.xlu0 4
  %237 = vperm.xlu0 %236, %v214
  %v238 = vpop.permute.xlu0 %237
  %v240 = vmul.f32 %v238, %v173
  %241 = vset.pattern.permute.xlu0 5
  %242 = vperm.xlu0 %241, %v214
  %v243 = vpop.permute.xlu0 %242
  %v245 = vmul.f32 %v243, %v177
  %246 = vset.pattern.permute.xlu0 6
  %247 = vperm.xlu0 %246, %v214
  %v248 = vpop.permute.xlu0 %247
  %v250 = vmul.f32 %v248, %v181
  %251 = vset.pattern.permute.xlu0 7
  %252 = vperm.xlu0 %251, %v214
  %v253 = vpop.permute.xlu0 %252
  %v255 = vmul.f32 %v253, %v185
  %256 = vset.pattern.permute.xlu0 8
  %257 = vperm.xlu0 %256, %v214
  %v258 = vpop.permute.xlu0 %257
  %v260 = vmul.f32 %v258, %v189
  %261 = vset.pattern.permute.xlu0 9
  %262 = vperm.xlu0 %261, %v214
  %v263 = vpop.permute.xlu0 %262
  %v265 = vmul.f32 %v263, %v193
  %v267 = vrot.slane %v220, 4
  %v269 = vadd.f32 %v134, %v267
  %v270 = vadd.f32 %v225, %v230
  %v271 = vadd.f32 %v235, %v240
  %v272 = vadd.f32 %v245, %v250
  %v273 = vadd.f32 %v255, %v260
  %v275 = vrot.slane %v270, 4
  %v277 = vadd.f32 %v269, %v275
  %v278 = vadd.f32 %v271, %v272
  %v279 = vadd.f32 %v273, %v265
  %v281 = vrot.slane %v278, 4
  %v283 = vadd.f32 %v277, %v281
  %v285 = vrot.slane %v279, 4
  %v287 = vadd.f32 %v283, %v285
  %v288 = vtanh.pop %v287
  %290 = vset.pattern.permute.xlu0 0
  %291 = vperm.xlu0 %290, %v288
  %v292 = vpop.permute.xlu0 %291
  %v294 = vmul.f32 %v292, %v157
  %295 = vset.pattern.permute.xlu0 1
  %296 = vperm.xlu0 %295, %v288
  %v297 = vpop.permute.xlu0 %296
  %v299 = vmul.f32 %v297, %v161
  %300 = vset.pattern.permute.xlu0 2
  %301 = vperm.xlu0 %300, %v288
  %v302 = vpop.permute.xlu0 %301
  %v304 = vmul.f32 %v302, %v165
  %305 = vset.pattern.permute.xlu0 3
  %306 = vperm.xlu0 %305, %v288
  %v307 = vpop.permute.xlu0 %306
  %v309 = vmul.f32 %v307, %v169
  %310 = vset.pattern.permute.xlu0 4
  %311 = vperm.xlu0 %310, %v288
  %v312 = vpop.permute.xlu0 %311
  %v314 = vmul.f32 %v312, %v173
  %315 = vset.pattern.permute.xlu0 5
  %316 = vperm.xlu0 %315, %v288
  %v317 = vpop.permute.xlu0 %316
  %v319 = vmul.f32 %v317, %v177
  %320 = vset.pattern.permute.xlu0 6
  %321 = vperm.xlu0 %320, %v288
  %v322 = vpop.permute.xlu0 %321
  %v324 = vmul.f32 %v322, %v181
  %325 = vset.pattern.permute.xlu0 7
  %326 = vperm.xlu0 %325, %v288
  %v327 = vpop.permute.xlu0 %326
  %v329 = vmul.f32 %v327, %v185
  %330 = vset.pattern.permute.xlu0 8
  %331 = vperm.xlu0 %330, %v288
  %v332 = vpop.permute.xlu0 %331
  %v334 = vmul.f32 %v332, %v189
  %335 = vset.pattern.permute.xlu0 9
  %336 = vperm.xlu0 %335, %v288
  %v337 = vpop.permute.xlu0 %336
  %v339 = vmul.f32 %v337, %v193
  %v341 = vrot.slane %v294, 4
  %v343 = vadd.f32 %v139, %v341
  %v344 = vadd.f32 %v299, %v304
  %v345 = vadd.f32 %v309, %v314
  %v346 = vadd.f32 %v319, %v324
  %v347 = vadd.f32 %v329, %v334
  %v349 = vrot.slane %v344, 4
  %v351 = vadd.f32 %v343, %v349
  %v352 = vadd.f32 %v345, %v346
  %v353 = vadd.f32 %v347, %v339
  %v355 = vrot.slane %v352, 4
  %v357 = vadd.f32 %v351, %v355
  %v359 = vrot.slane %v353, 4
  %v361 = vadd.f32 %v357, %v359
  %v362 = vtanh.pop %v361
  %364 = vset.pattern.permute.xlu0 0
  %365 = vperm.xlu0 %364, %v362
  %v366 = vpop.permute.xlu0 %365
  %v368 = vmul.f32 %v366, %v157
  %369 = vset.pattern.permute.xlu0 1
  %370 = vperm.xlu0 %369, %v362
  %v371 = vpop.permute.xlu0 %370
  %v373 = vmul.f32 %v371, %v161
  %374 = vset.pattern.permute.xlu0 2
  %375 = vperm.xlu0 %374, %v362
  %v376 = vpop.permute.xlu0 %375
  %v378 = vmul.f32 %v376, %v165
  %379 = vset.pattern.permute.xlu0 3
  %380 = vperm.xlu0 %379, %v362
  %v381 = vpop.permute.xlu0 %380
  %v383 = vmul.f32 %v381, %v169
  %384 = vset.pattern.permute.xlu0 4
  %385 = vperm.xlu0 %384, %v362
  %v386 = vpop.permute.xlu0 %385
  %v388 = vmul.f32 %v386, %v173
  %389 = vset.pattern.permute.xlu0 5
  %390 = vperm.xlu0 %389, %v362
  %v391 = vpop.permute.xlu0 %390
  %v393 = vmul.f32 %v391, %v177
  %394 = vset.pattern.permute.xlu0 6
  %395 = vperm.xlu0 %394, %v362
  %v396 = vpop.permute.xlu0 %395
  %v398 = vmul.f32 %v396, %v181
  %399 = vset.pattern.permute.xlu0 7
  %400 = vperm.xlu0 %399, %v362
  %v401 = vpop.permute.xlu0 %400
  %v403 = vmul.f32 %v401, %v185
  %404 = vset.pattern.permute.xlu0 8
  %405 = vperm.xlu0 %404, %v362
  %v406 = vpop.permute.xlu0 %405
  %v408 = vmul.f32 %v406, %v189
  %409 = vset.pattern.permute.xlu0 9
  %410 = vperm.xlu0 %409, %v362
  %v411 = vpop.permute.xlu0 %410
  %v413 = vmul.f32 %v411, %v193
  %v415 = vrot.slane %v368, 4
  %v417 = vadd.f32 %v139, %v415
  %v418 = vadd.f32 %v373, %v378
  %v419 = vadd.f32 %v383, %v388
  %v420 = vadd.f32 %v393, %v398
  %v421 = vadd.f32 %v403, %v408
  %v423 = vrot.slane %v418, 4
  %v425 = vadd.f32 %v417, %v423
  %v426 = vadd.f32 %v419, %v420
  %v427 = vadd.f32 %v421, %v413
  %v429 = vrot.slane %v426, 4
  %v431 = vadd.f32 %v425, %v429
  %v433 = vrot.slane %v427, 4
  %v435 = vadd.f32 %v431, %v433
  %v436 = vtanh.pop %v435
  %438 = vset.pattern.permute.xlu0 0
  %439 = vperm.xlu0 %438, %v436
  %v440 = vpop.permute.xlu0 %439
  %v442 = vmul.f32 %v440, %v157
  %443 = vset.pattern.permute.xlu0 1
  %444 = vperm.xlu0 %443, %v436
  %v445 = vpop.permute.xlu0 %444
  %v447 = vmul.f32 %v445, %v161
  %448 = vset.pattern.permute.xlu0 2
  %449 = vperm.xlu0 %448, %v436
  %v450 = vpop.permute.xlu0 %449
  %v452 = vmul.f32 %v450, %v165
  %453 = vset.pattern.permute.xlu0 3
  %454 = vperm.xlu0 %453, %v436
  %v455 = vpop.permute.xlu0 %454
  %v457 = vmul.f32 %v455, %v169
  %458 = vset.pattern.permute.xlu0 4
  %459 = vperm.xlu0 %458, %v436
  %v460 = vpop.permute.xlu0 %459
  %v462 = vmul.f32 %v460, %v173
  %463 = vset.pattern.permute.xlu0 5
  %464 = vperm.xlu0 %463, %v436
  %v465 = vpop.permute.xlu0 %464
  %v467 = vmul.f32 %v465, %v177
  %468 = vset.pattern.permute.xlu0 6
  %469 = vperm.xlu0 %468, %v436
  %v470 = vpop.permute.xlu0 %469
  %v472 = vmul.f32 %v470, %v181
  %473 = vset.pattern.permute.xlu0 7
  %474 = vperm.xlu0 %473, %v436
  %v475 = vpop.permute.xlu0 %474
  %v477 = vmul.f32 %v475, %v185
  %478 = vset.pattern.permute.xlu0 8
  %479 = vperm.xlu0 %478, %v436
  %v480 = vpop.permute.xlu0 %479
  %v482 = vmul.f32 %v480, %v189
  %483 = vset.pattern.permute.xlu0 9
  %484 = vperm.xlu0 %483, %v436
  %v485 = vpop.permute.xlu0 %484
  %v487 = vmul.f32 %v485, %v193
  %v489 = vrot.slane %v442, 4
  %v491 = vadd.f32 %v144, %v489
  %v492 = vadd.f32 %v447, %v452
  %v493 = vadd.f32 %v457, %v462
  %v494 = vadd.f32 %v467, %v472
  %v495 = vadd.f32 %v477, %v482
  %v497 = vrot.slane %v492, 4
  %v499 = vadd.f32 %v491, %v497
  %v500 = vadd.f32 %v493, %v494
  %v501 = vadd.f32 %v495, %v487
  %v503 = vrot.slane %v500, 4
  %v505 = vadd.f32 %v499, %v503
  %v507 = vrot.slane %v501, 4
  %v509 = vadd.f32 %v505, %v507
  %v510 = vtanh.pop %v509
  %512 = vset.pattern.permute.xlu0 0
  %513 = vperm.xlu0 %512, %v510
  %v514 = vpop.permute.xlu0 %513
  %v516 = vmul.f32 %v514, %v157
  %517 = vset.pattern.permute.xlu0 1
  %518 = vperm.xlu0 %517, %v510
  %v519 = vpop.permute.xlu0 %518
  %v521 = vmul.f32 %v519, %v161
  %522 = vset.pattern.permute.xlu0 2
  %523 = vperm.xlu0 %522, %v510
  %v524 = vpop.permute.xlu0 %523
  %v526 = vmul.f32 %v524, %v165
  %527 = vset.pattern.permute.xlu0 3
  %528 = vperm.xlu0 %527, %v510
  %v529 = vpop.permute.xlu0 %528
  %v531 = vmul.f32 %v529, %v169
  %532 = vset.pattern.permute.xlu0 4
  %533 = vperm.xlu0 %532, %v510
  %v534 = vpop.permute.xlu0 %533
  %v536 = vmul.f32 %v534, %v173
  %537 = vset.pattern.permute.xlu0 5
  %538 = vperm.xlu0 %537, %v510
  %v539 = vpop.permute.xlu0 %538
  %v541 = vmul.f32 %v539, %v177
  %542 = vset.pattern.permute.xlu0 6
  %543 = vperm.xlu0 %542, %v510
  %v544 = vpop.permute.xlu0 %543
  %v546 = vmul.f32 %v544, %v181
  %547 = vset.pattern.permute.xlu0 7
  %548 = vperm.xlu0 %547, %v510
  %v549 = vpop.permute.xlu0 %548
  %v551 = vmul.f32 %v549, %v185
  %552 = vset.pattern.permute.xlu0 8
  %553 = vperm.xlu0 %552, %v510
  %v554 = vpop.permute.xlu0 %553
  %v556 = vmul.f32 %v554, %v189
  %557 = vset.pattern.permute.xlu0 9
  %558 = vperm.xlu0 %557, %v510
  %v559 = vpop.permute.xlu0 %558
  %v561 = vmul.f32 %v559, %v193
  %v563 = vrot.slane %v516, 4
  %v565 = vadd.f32 %v144, %v563
  %v566 = vadd.f32 %v521, %v526
  %v567 = vadd.f32 %v531, %v536
  %v568 = vadd.f32 %v541, %v546
  %v569 = vadd.f32 %v551, %v556
  %v571 = vrot.slane %v566, 4
  %v573 = vadd.f32 %v565, %v571
  %v574 = vadd.f32 %v567, %v568
  %v575 = vadd.f32 %v569, %v561
  %v577 = vrot.slane %v574, 4
  %v579 = vadd.f32 %v573, %v577
  %v581 = vrot.slane %v575, 4
  %v583 = vadd.f32 %v579, %v581
  %v584 = vtanh.pop %v583
  %586 = vset.pattern.permute.xlu0 0
  %587 = vperm.xlu0 %586, %v584
  %v588 = vpop.permute.xlu0 %587
  %v590 = vmul.f32 %v588, %v157
  %591 = vset.pattern.permute.xlu0 1
  %592 = vperm.xlu0 %591, %v584
  %v593 = vpop.permute.xlu0 %592
  %v595 = vmul.f32 %v593, %v161
  %596 = vset.pattern.permute.xlu0 2
  %597 = vperm.xlu0 %596, %v584
  %v598 = vpop.permute.xlu0 %597
  %v600 = vmul.f32 %v598, %v165
  %601 = vset.pattern.permute.xlu0 3
  %602 = vperm.xlu0 %601, %v584
  %v603 = vpop.permute.xlu0 %602
  %v605 = vmul.f32 %v603, %v169
  %606 = vset.pattern.permute.xlu0 4
  %607 = vperm.xlu0 %606, %v584
  %v608 = vpop.permute.xlu0 %607
  %v610 = vmul.f32 %v608, %v173
  %611 = vset.pattern.permute.xlu0 5
  %612 = vperm.xlu0 %611, %v584
  %v613 = vpop.permute.xlu0 %612
  %v615 = vmul.f32 %v613, %v177
  %616 = vset.pattern.permute.xlu0 6
  %617 = vperm.xlu0 %616, %v584
  %v618 = vpop.permute.xlu0 %617
  %v620 = vmul.f32 %v618, %v181
  %621 = vset.pattern.permute.xlu0 7
  %622 = vperm.xlu0 %621, %v584
  %v623 = vpop.permute.xlu0 %622
  %v625 = vmul.f32 %v623, %v185
  %626 = vset.pattern.permute.xlu0 8
  %627 = vperm.xlu0 %626, %v584
  %v628 = vpop.permute.xlu0 %627
  %v630 = vmul.f32 %v628, %v189
  %631 = vset.pattern.permute.xlu0 9
  %632 = vperm.xlu0 %631, %v584
  %v633 = vpop.permute.xlu0 %632
  %v635 = vmul.f32 %v633, %v193
  %v637 = vrot.slane %v590, 4
  %v639 = vadd.f32 %v149, %v637
  %v640 = vadd.f32 %v595, %v600
  %v641 = vadd.f32 %v605, %v610
  %v642 = vadd.f32 %v615, %v620
  %v643 = vadd.f32 %v625, %v630
  %v645 = vrot.slane %v640, 4
  %v647 = vadd.f32 %v639, %v645
  %v648 = vadd.f32 %v641, %v642
  %v649 = vadd.f32 %v643, %v635
  %v651 = vrot.slane %v648, 4
  %v653 = vadd.f32 %v647, %v651
  %v655 = vrot.slane %v649, 4
  %v657 = vadd.f32 %v653, %v655
  %v658 = vtanh.pop %v657
  %660 = vset.pattern.permute.xlu0 0
  %661 = vperm.xlu0 %660, %v658
  %v662 = vpop.permute.xlu0 %661
  %v664 = vmul.f32 %v662, %v157
  %665 = vset.pattern.permute.xlu0 1
  %666 = vperm.xlu0 %665, %v658
  %v667 = vpop.permute.xlu0 %666
  %v669 = vmul.f32 %v667, %v161
  %670 = vset.pattern.permute.xlu0 2
  %671 = vperm.xlu0 %670, %v658
  %v672 = vpop.permute.xlu0 %671
  %v674 = vmul.f32 %v672, %v165
  %675 = vset.pattern.permute.xlu0 3
  %676 = vperm.xlu0 %675, %v658
  %v677 = vpop.permute.xlu0 %676
  %v679 = vmul.f32 %v677, %v169
  %680 = vset.pattern.permute.xlu0 4
  %681 = vperm.xlu0 %680, %v658
  %v682 = vpop.permute.xlu0 %681
  %v684 = vmul.f32 %v682, %v173
  %685 = vset.pattern.permute.xlu0 5
  %686 = vperm.xlu0 %685, %v658
  %v687 = vpop.permute.xlu0 %686
  %v689 = vmul.f32 %v687, %v177
  %690 = vset.pattern.permute.xlu0 6
  %691 = vperm.xlu0 %690, %v658
  %v692 = vpop.permute.xlu0 %691
  %v694 = vmul.f32 %v692, %v181
  %695 = vset.pattern.permute.xlu0 7
  %696 = vperm.xlu0 %695, %v658
  %v697 = vpop.permute.xlu0 %696
  %v699 = vmul.f32 %v697, %v185
  %700 = vset.pattern.permute.xlu0 8
  %701 = vperm.xlu0 %700, %v658
  %v702 = vpop.permute.xlu0 %701
  %v704 = vmul.f32 %v702, %v189
  %705 = vset.pattern.permute.xlu0 9
  %706 = vperm.xlu0 %705, %v658
  %v707 = vpop.permute.xlu0 %706
  %v709 = vmul.f32 %v707, %v193
  %v711 = vrot.slane %v664, 4
  %v713 = vadd.f32 %v149, %v711
  %v714 = vadd.f32 %v669, %v674
  %v715 = vadd.f32 %v679, %v684
  %v716 = vadd.f32 %v689, %v694
  %v717 = vadd.f32 %v699, %v704
  %v719 = vrot.slane %v714, 4
  %v721 = vadd.f32 %v713, %v719
  %v722 = vadd.f32 %v715, %v716
  %v723 = vadd.f32 %v717, %v709
  %v725 = vrot.slane %v722, 4
  %v727 = vadd.f32 %v721, %v725
  %v729 = vrot.slane %v723, 4
  %v731 = vadd.f32 %v727, %v729
  %v732 = vtanh.pop %v731
  %v733 = vsel %vm63, %v214, %v288
  %v734 = vsel %vm63, %v362, %v436
  %v735 = vsel %vm63, %v510, %v584
  %v736 = vsel %vm63, %v658, %v732
  %v737 = vld [vmem:[%s4] sm:$0xff]
  %v738 = vld [vmem:[%s4 + $0x8] sm:$0x3]
  %v739 = vld [vmem:[%s5] sm:$0x1]
  %v741 = vlaneseq
  %v742 = vshrl.u32 %v741, 7
  %v743 = vsub.s32 0, %v742
  %v744 = vrot.slane %v739, %v743
  %vm746 = vcmask 80896
  %v748 = vsel %vm746, %v733, 0
  %v751 = vsel %vm746, %v734, 0
  %v754 = vsel %vm746, %v735, 0
  %v757 = vsel %vm746, %v736, 0
  %vm759 = vcmask 1041408
  %v761 = vsel %vm759, %v738, 0
  %763 = vmatprep.subr.mxu0 0.0
  %764 = vmatpush1.msra.mxu0 %v737
  %765 = vmatprep.subr.mxu0 0.0
  %766 = vmatpush1.msra.mxu0 %v761
  %767 = vmatprep.subr.mxu0 0.0
  %768 = vmatpush1.msra.mxu0 0.0
  %769 = vmatprep.subr.mxu0 0.0
  %770 = vmatpush1.msra.mxu0 0.0
  %771 = vmatprep.subr.mxu0 0.0
  %772 = vmatpush1.msra.mxu0 0.0
  %773 = vmatprep.subr.mxu0 0.0
  %774 = vmatpush1.msra.mxu0 0.0
  %775 = vmatprep.subr.mxu0 0.0
  %776 = vmatpush1.msra.mxu0 0.0
  %777 = vmatprep.subr.mxu0 0.0
  %778 = vmatpush1.msra.mxu0 0.0
  %779 = vmatprep.subr.mxu0 0.0
  %780 = vmatpush1.msra.mxu0 0.0
  %781 = vmatprep.subr.mxu0 0.0
  %782 = vmatpush1.msra.mxu0 0.0
  %783 = vmatprep.subr.mxu0 0.0
  %784 = vmatpush1.msra.mxu0 0.0
  %785 = vmatprep.subr.mxu0 0.0
  %786 = vmatpush1.msra.mxu0 0.0
  %787 = vmatprep.subr.mxu0 0.0
  %788 = vmatpush1.msra.mxu0 0.0
  %789 = vmatprep.subr.mxu0 0.0
  %790 = vmatpush1.msra.mxu0 0.0
  %791 = vmatprep.subr.mxu0 0.0
  %792 = vmatpush1.msra.mxu0 0.0
  %793 = vmatprep.subr.mxu0 0.0
  %794 = vmatpush1.msra.mxu0 0.0
  %795 = vmatprep.subr.mxu0 0.0
  %796 = vmatpush1.msra.mxu0 0.0
  %797 = vmatprep.subr.mxu0 0.0
  %798 = vmatpush1.msra.mxu0 0.0
  %799 = vmatprep.subr.mxu0 0.0
  %800 = vmatpush1.msra.mxu0 0.0
  %801 = vmatprep.subr.mxu0 0.0
  %802 = vmatpush1.msra.mxu0 0.0
  %803 = vmatprep.subr.mxu0 0.0
  %804 = vmatpush1.msra.mxu0 0.0
  %805 = vmatprep.subr.mxu0 0.0
  %806 = vmatpush1.msra.mxu0 0.0
  %807 = vmatprep.subr.mxu0 0.0
  %808 = vmatpush1.msra.mxu0 0.0
  %809 = vmatprep.subr.mxu0 0.0
  %810 = vmatpush1.msra.mxu0 0.0
  %811 = vmatprep.subr.mxu0 0.0
  %812 = vmatpush1.msra.mxu0 0.0
  %813 = vmatprep.subr.mxu0 0.0
  %814 = vmatpush1.msra.mxu0 0.0
  %815 = vmatprep.subr.mxu0 0.0
  %816 = vmatpush1.msra.mxu0 0.0
  %817 = vmatprep.subr.mxu0 0.0
  %818 = vmatpush1.msra.mxu0 0.0
  %819 = vmatprep.subr.mxu0 0.0
  %820 = vmatpush1.msra.mxu0 0.0
  %821 = vmatprep.subr.mxu0 0.0
  %822 = vmatpush1.msra.mxu0 0.0
  %823 = vmatprep.subr.mxu0 0.0
  %824 = vmatpush1.msra.mxu0 0.0
  %825 = vmatprep.subr.mxu0 0.0
  %826 = vmatpush1.msra.mxu0 0.0
  %827 = vmatprep.mubr.f32.mxu0 0.0
  %828 = vmatmul.mubr.f32.gmra.mrb[0].mxu0 %v748
  %v829 = vpop.f32.mrb[0].mxu0
  %v830 = vadd.f32 %v744, %v829
  %v831 = vpop.f32.mrb[0].mxu0
  %832 = vmatprep.mubr.f32.mxu0 0.0
  %833 = vmatmul.mubr.f32.gmra.mrb[0].mxu0 %v751
  %v834 = vpop.f32.mrb[0].mxu0
  %v835 = vadd.f32 %v744, %v834
  %v836 = vpop.f32.mrb[0].mxu0
  %837 = vmatprep.mubr.f32.mxu0 0.0
  %838 = vmatmul.mubr.f32.gmra.mrb[0].mxu0 %v754
  %v839 = vpop.f32.mrb[0].mxu0
  %v840 = vadd.f32 %v744, %v839
  %v841 = vpop.f32.mrb[0].mxu0
  %842 = vmatprep.mubr.f32.mxu0 0.0
  %843 = vmatmul.mubr.f32.gmra.mrb[0].mxu0 %v757
  %v844 = vpop.f32.mrb[0].mxu0
  %v845 = vadd.f32 %v744, %v844
  %v846 = vpop.f32.mrb[0].mxu0
  %847 = vdwg.mxu0
  %v848 = vxor.u32 %v830, 2147483648
  %v849 = vxor.u32 %v835, 2147483648
  %v850 = vxor.u32 %v840, 2147483648
  %v851 = vxor.u32 %v845, 2147483648
  %v852 = vmul.f32 %v848, 1.442695
  %v853 = vpow.pop %v852
  %v854 = vmul.f32 %v849, 1.442695
  %v855 = vpow.pop %v854
  %v856 = vmul.f32 %v850, 1.442695
  %v857 = vpow.pop %v856
  %v858 = vmul.f32 %v851, 1.442695
  %v859 = vpow.pop %v858
  %v860 = vadd.f32 %v853, 1.0
  %v861 = vadd.f32 %v855, 1.0
  %v862 = vadd.f32 %v857, 1.0
  %v863 = vadd.f32 %v859, 1.0
  %v864 = vrcp.pop %v860
  %v865 = vmul.f32 1.0, %v864
  %v866 = vrcp.pop %v861
  %v867 = vmul.f32 1.0, %v866
  %v868 = vrcp.pop %v862
  %v869 = vmul.f32 1.0, %v868
  %v870 = vrcp.pop %v863
  %v871 = vmul.f32 1.0, %v870
  %vm872 = vcmask 23552
  %873 = vst.msk [vmem:[%s6] sm:$0xff] %vm872, %v865
  %874 = vst.msk [vmem:[%s6 + $0x8] sm:$0xff] %vm872, %v867
  %875 = vst.msk [vmem:[%s6 + $0x10] sm:$0xff] %vm872, %v869
  %876 = vst.msk [vmem:[%s6 + $0x18] sm:$0xff] %vm872, %v871
  // Predicated region
  $region26: #{causal_rnn_forward.1} parent=0 // pred_check
    _
  $region27: #{causal_rnn_forward.1} parent=0 // pred_check_branch
    %878 = sbr.rel (0) target = $region29
  $region28: #{causal_rnn_forward.1} parent=0 // pred_region
    _
  $region29: #{causal_rnn_forward.1} parent=0 // pred_fallthru
    _
  // Predicated region
  $region30: #{causal_rnn_forward.1} parent=0 // pred_check
    _
  $region31: #{causal_rnn_forward.1} parent=0 // pred_check_branch
    %880 = sbr.rel (0) target = $region33
  $region32: #{causal_rnn_forward.1} parent=0 // pred_region
    _
  $region33: #{causal_rnn_forward.1} parent=0 // pred_fallthru
    _

</llo_original>
